<compile_context>
chip_gen: v7x
topology: tpu7x:2x2x1
jax: 0.10.0
libtpu: 0.0.40
codegen_flags: <defaults>
</compile_context>

<pallas_src>
import numpy as np
import jax
import jax.numpy as jnp
from jax import lax
from jax.experimental import pallas as pl
from jax.experimental.pallas import tpu as pltpu

# ----------------------------- small config ---------------------------------
BATCH        = 2
SEQ          = 8      # max_seq_len
HIDDEN       = 32     # synthetic "BERT" hidden size (stands in for 768)
REDUCED      = 32     # stands in for reduced_dim = 512
WIDTH_DIM    = 16     # stands in for span_width_embedding_dim = 128
MAX_SPAN_LEN = 4      # stands in for max_span_len = 50
NUM_LABELS   = 5
LABEL_SUB    = 8      # label axis padded to 8 sublanes (sliced back outside)
NS_LANE      = 128    # span axis padded to 128 lanes (sliced back outside)
VOCAB        = 64
LEAKY_SLOPE  = 0.01   # F.leaky_relu default negative_slope


# ------------------------- static span bookkeeping --------------------------
def build_span_tables(seq_len, max_span_len, lane_pad=NS_LANE):
    """Reproduces `triangle_mask.nonzero()` ordering (row-major) from torch."""
    tri = (np.triu(np.ones((seq_len, seq_len)), k=0)
           - np.triu(np.ones((seq_len, seq_len)), k=max_span_len))
    span_idx = np.argwhere(tri > 0).astype(np.int32)          # (NS, 2) = (start, end)
    ns = span_idx.shape[0]
    ns_lane = ((ns + lane_pad - 1) // lane_pad) * lane_pad
    starts = np.ones((1, ns_lane), np.int32)                   # padded lanes: empty span (1 > 0)
    ends = np.zeros((1, ns_lane), np.int32)
    starts[0, :ns] = span_idx[:, 0]
    ends[0, :ns] = span_idx[:, 1]
    widths = (span_idx[:, 1] - span_idx[:, 0]).astype(np.int32)  # in [0, max_span_len-1]
    return span_idx, starts, ends, widths, ns, ns_lane


(SPAN_IDX_NP, STARTS_ROW_NP, ENDS_ROW_NP,
 WIDTHS_NP, NUM_SPANS, _NS_LANE) = build_span_tables(SEQ, MAX_SPAN_LEN)
assert _NS_LANE == NS_LANE


# ------------------------------ fused Pallas kernel ---------------------------
def _nner_fused_kernel(emb_ref, mask_ref, enc_w_ref, enc_b_ref,
                       red_w_ref, red_b_ref, attn_ref,
                       starts_ref, ends_ref, cls_ref, wl_ref, o_ref):
    """Whole batch in one step; everything stays resident in VMEM."""
    # --- synthetic encoder + F.leaky_relu over the stacked (B*S, H) token slab
    x = emb_ref[...]                                               # (B*S, H) bf16
    h = (jnp.dot(x, enc_w_ref[...], preferred_element_type=jnp.float32)
         + enc_b_ref[...])                                         # (B*S, H) f32
    h = jnp.maximum(h, LEAKY_SLOPE * h)                            # leaky_relu

    # --- dimension reduction (kept resident; never hits HBM)
    h_bf = h.astype(jnp.bfloat16)
    tok_red = (jnp.dot(h_bf, red_w_ref[...], preferred_element_type=jnp.float32)
               + red_b_ref[...])                                   # (B*S, R) f32
    tok_red_bf = tok_red.astype(jnp.bfloat16)

    # --- attention score per token: rank-1 fold (red_w @ attn_w^T) applied as a
    #     VPU multiply + lane reduce; no (NS, H) operand, no extra MXU pass.
    scores = jnp.sum(h * attn_ref[...], axis=1, keepdims=True)     # (B*S, 1) f32

    seq_mask = mask_ref[...]                                       # (B*S, 1) f32
    cls_bf = cls_ref[...].astype(jnp.bfloat16)                     # (L8, R)
    wl = wl_ref[...]                                               # (L8, NSL) width part + bias

    # span membership (batch-invariant): token index on sublanes, spans on lanes
    tok_iota = lax.broadcasted_iota(jnp.int32, (SEQ, NS_LANE), 0)
    member = (tok_iota >= starts_ref[...]) & (tok_iota <= ends_ref[...])  # (S, NSL)

    for b in range(BATCH):                                         # unrolled (B tiny)
        lo, hi = b * SEQ, (b + 1) * SEQ
        sc_b = scores[lo:hi]                                       # (S, 1)
        m_b = seq_mask[lo:hi]                                      # (S, 1)
        tr_b = tok_red_bf[lo:hi]                                   # (S, R) bf16

        valid = member & (m_b > 0.0)                               # (S, NSL)
        masked = jnp.where(valid, sc_b, -1e9)                      # f32
        mx = jnp.max(masked, axis=0, keepdims=True)                # (1, NSL)
        e = jnp.exp(masked - mx) * valid.astype(jnp.float32)
        denom = jnp.maximum(jnp.sum(e, axis=0, keepdims=True), 1e-9)
        p_t = (e * pl.reciprocal(denom, approx=True)).astype(jnp.bfloat16)  # (S, NSL)

        # span_sem^T = tok_red_b^T @ p_t  -> (R, NSL), spans stay on lanes
        span_sem_t = lax.dot_general(tr_b, p_t, (((0,), (0,)), ((), ())),
                                     preferred_element_type=jnp.float32)
        logits_t = (jnp.dot(cls_bf, span_sem_t.astype(jnp.bfloat16),
                            preferred_element_type=jnp.float32) + wl)        # (L8, NSL)
        o_ref[b] = logits_t.astype(o_ref.dtype)


# ------------------------------ parameters -----------------------------------
def init_params(key):
    ks = jax.random.split(key, 8)
    s = 0.05
    return {
        "tok_emb":  jax.random.normal(ks[0], (VOCAB, HIDDEN), jnp.float32) * s,
        "enc_w":    jax.random.normal(ks[1], (HIDDEN, HIDDEN), jnp.float32) * s,
        "enc_b":    jnp.zeros((HIDDEN,), jnp.float32),
        "red_w":    jax.random.normal(ks[2], (HIDDEN, REDUCED), jnp.float32) * s,
        "red_b":    jnp.zeros((REDUCED,), jnp.float32),
        "attn_w":   jax.random.normal(ks[3], (1, REDUCED), jnp.float32) * s,
        "width_emb": jax.random.normal(ks[4], (MAX_SPAN_LEN, WIDTH_DIM), jnp.float32) * s,
        "cls_w":    jax.random.normal(ks[5], (REDUCED + WIDTH_DIM, NUM_LABELS), jnp.float32) * s,
        "cls_b":    jnp.zeros((NUM_LABELS,), jnp.float32),
    }


# -------------------------------- forward ------------------------------------
@jax.jit
def forward(params, input_ids, attention_mask):
    B, S = input_ids.shape
    assert B == BATCH and S == SEQ

    # glue: embedding gather (stand-in for BERT's embedding layer)
    emb2d = params["tok_emb"][input_ids].reshape(B * S, HIDDEN).astype(jnp.bfloat16)
    maskcol = attention_mask.astype(jnp.float32).reshape(B * S, 1)

    # batch-invariant precomputes (tiny; folded / hoisted at trace time under jit)
    attn_row = (params["red_w"] @ params["attn_w"].T).T                      # (1, H) rank-1 fold
    cls_t = jnp.zeros((LABEL_SUB, REDUCED), jnp.float32)
    cls_t = cls_t.at[:NUM_LABELS].set(params["cls_w"][:REDUCED].T)           # labels on sublanes
    width_logits = (params["width_emb"][jnp.asarray(WIDTHS_NP)]
                    @ params["cls_w"][REDUCED:]) + params["cls_b"]           # (NS, L)
    wl_t = jnp.zeros((LABEL_SUB, NS_LANE), jnp.float32)
    wl_t = wl_t.at[:NUM_LABELS, :NUM_SPANS].set(width_logits.T)

    out_t = pl.pallas_call(
        _nner_fused_kernel,
        out_shape=jax.ShapeDtypeStruct((B, LABEL_SUB, NS_LANE), jnp.float32),
        grid=(1,),   # whole batch in one step (on v7x one could shard grid=(B,) "parallel")
        in_specs=[
            pl.BlockSpec((B * SEQ, HIDDEN),     lambda i: (0, 0)),   # token embeddings (bf16)
            pl.BlockSpec((B * SEQ, 1),          lambda i: (0, 0)),   # attention mask column
            pl.BlockSpec((HIDDEN, HIDDEN),      lambda i: (0, 0)),   # enc_w (bf16)
            pl.BlockSpec((1, HIDDEN),           lambda i: (0, 0)),   # enc_b
            pl.BlockSpec((HIDDEN, REDUCED),     lambda i: (0, 0)),   # red_w (bf16)
            pl.BlockSpec((1, REDUCED),          lambda i: (0, 0)),   # red_b
            pl.BlockSpec((1, HIDDEN),           lambda i: (0, 0)),   # folded attn vector
            pl.BlockSpec((1, NS_LANE),          lambda i: (0, 0)),   # span starts (lanes)
            pl.BlockSpec((1, NS_LANE),          lambda i: (0, 0)),   # span ends (lanes)
            pl.BlockSpec((LABEL_SUB, REDUCED),  lambda i: (0, 0)),   # classifier^T (semantic part)
            pl.BlockSpec((LABEL_SUB, NS_LANE),  lambda i: (0, 0)),   # width logits^T (+bias)
        ],
        out_specs=pl.BlockSpec((B, LABEL_SUB, NS_LANE), lambda i: (0, 0, 0)),
        compiler_params=pltpu.CompilerParams(dimension_semantics=("arbitrary",)),
    )(emb2d, maskcol,
      params["enc_w"].astype(jnp.bfloat16), params["enc_b"][None, :],
      params["red_w"].astype(jnp.bfloat16), params["red_b"][None, :],
      attn_row,
      jnp.asarray(STARTS_ROW_NP), jnp.asarray(ENDS_ROW_NP),
      cls_t, wl_t)

    # strip label/span padding and restore (B, NS, L) orientation
    logits = jnp.transpose(out_t[:, :NUM_LABELS, :NUM_SPANS], (0, 2, 1))
    span_indices = jnp.broadcast_to(jnp.asarray(SPAN_IDX_NP)[None],
                                    (B, NUM_SPANS, 2))
    return logits, span_indices


# ----------------------- pure-JAX reference (f32) ------------------------------
def reference_forward(params, input_ids, attention_mask):
    B, S = input_ids.shape
    emb = params["tok_emb"][input_ids]                                       # (B, S, H)
    h = jnp.einsum("bsh,hk->bsk", emb, params["enc_w"]) + params["enc_b"]
    h = jnp.where(h >= 0, h, LEAKY_SLOPE * h)
    tok_red = jnp.einsum("bsh,hr->bsr", h, params["red_w"]) + params["red_b"]
    scores = jnp.einsum("bsr,r->bs", tok_red, params["attn_w"][0])           # (B, S)

    starts = jnp.asarray(SPAN_IDX_NP[:, 0]); ends = jnp.asarray(SPAN_IDX_NP[:, 1])
    tok = jnp.arange(S)
    member = (tok[None, :] >= starts[:, None]) & (tok[None, :] <= ends[:, None])  # (NS, S)
    valid = member[None] & (attention_mask[:, None, :] > 0)                  # (B, NS, S)
    sc = jnp.where(valid, scores[:, None, :], -1e9)
    sc = sc - sc.max(-1, keepdims=True)
    e = jnp.exp(sc) * valid
    p = e / jnp.maximum(e.sum(-1, keepdims=True), 1e-9)
    span_sem = jnp.einsum("bns,bsr->bnr", p, tok_red)                        # (B, NS, R)
    wemb = params["width_emb"][jnp.asarray(WIDTHS_NP)]                       # (NS, W)
    span_emb = jnp.concatenate(
        [span_sem, jnp.broadcast_to(wemb[None], (B,) + wemb.shape)], axis=-1)
    return span_emb @ params["cls_w"] + params["cls_b"]                      # (B, NS, L)


# ---------------------------------- main --------------------------------------
if __name__ == "__main__":
    key = jax.random.PRNGKey(0)
    k_param, k_ids = jax.random.split(key)

    params = init_params(k_param)
    input_ids = jax.random.randint(k_ids, (BATCH, SEQ), 0, VOCAB, dtype=jnp.int32)
    attention_mask = jnp.array([[1] * SEQ,
                                [1] * (SEQ - 2) + [0] * 2], dtype=jnp.int32)

    logits, span_indices = forward(params, input_ids, attention_mask)
    logits = jax.block_until_ready(logits)
    span_indices = jax.block_until_ready(span_indices)

    assert logits.shape == (BATCH, NUM_SPANS, NUM_LABELS), logits.shape
    assert span_indices.shape == (BATCH, NUM_SPANS, 2), span_indices.shape
    assert bool(jnp.all(jnp.isfinite(logits)))

    ref = reference_forward(params, input_ids, attention_mask)
    max_err = float(jnp.max(jnp.abs(logits - ref)))
    assert bool(jnp.allclose(logits, ref, atol=5e-3, rtol=5e-2)), max_err

    print("KERNEL_OK")
</pallas_src>

<mosaic_0001>
module attributes {stable_mosaic.version = 11 : i64} {
  func.func @_nner_fused_kernel(%arg0: i32, %arg1: memref<16x32xbf16, #tpu.memory_space<vmem>>, %arg2: memref<16x1xf32, #tpu.memory_space<vmem>>, %arg3: memref<32x32xbf16, #tpu.memory_space<vmem>>, %arg4: memref<1x32xf32, #tpu.memory_space<vmem>>, %arg5: memref<32x32xbf16, #tpu.memory_space<vmem>>, %arg6: memref<1x32xf32, #tpu.memory_space<vmem>>, %arg7: memref<1x32xf32, #tpu.memory_space<vmem>>, %arg8: memref<1x128xi32, #tpu.memory_space<vmem>>, %arg9: memref<1x128xi32, #tpu.memory_space<vmem>>, %arg10: memref<8x32xf32, #tpu.memory_space<vmem>>, %arg11: memref<8x128xf32, #tpu.memory_space<vmem>>, %arg12: memref<2x8x128xf32, #tpu.memory_space<vmem>>) attributes {dimension_semantics = [#tpu.dimension_semantics<arbitrary>], iteration_bounds = array<i64: 1>, scalar_prefetch = 0 : i64, scratch_operands = 0 : i64, tpu.core_type = #tpu.core_type<tc>, window_params = [{pipeline_mode = #tpu.pipeline_mode<synchronous>, transform_indices = @transform_0, window_bounds = array<i64: 16, 32>}, {pipeline_mode = #tpu.pipeline_mode<synchronous>, transform_indices = @transform_1, window_bounds = array<i64: 16, 1>}, {pipeline_mode = #tpu.pipeline_mode<synchronous>, transform_indices = @transform_2, window_bounds = array<i64: 32, 32>}, {pipeline_mode = #tpu.pipeline_mode<synchronous>, transform_indices = @transform_3, window_bounds = array<i64: 1, 32>}, {pipeline_mode = #tpu.pipeline_mode<synchronous>, transform_indices = @transform_4, window_bounds = array<i64: 32, 32>}, {pipeline_mode = #tpu.pipeline_mode<synchronous>, transform_indices = @transform_5, window_bounds = array<i64: 1, 32>}, {pipeline_mode = #tpu.pipeline_mode<synchronous>, transform_indices = @transform_6, window_bounds = array<i64: 1, 32>}, {pipeline_mode = #tpu.pipeline_mode<synchronous>, transform_indices = @transform_7, window_bounds = array<i64: 1, 128>}, {pipeline_mode = #tpu.pipeline_mode<synchronous>, transform_indices = @transform_8, window_bounds = array<i64: 1, 128>}, {pipeline_mode = #tpu.pipeline_mode<synchronous>, transform_indices = @transform_9, window_bounds = array<i64: 8, 32>}, {pipeline_mode = #tpu.pipeline_mode<synchronous>, transform_indices = @transform_10, window_bounds = array<i64: 8, 128>}, {pipeline_mode = #tpu.pipeline_mode<synchronous>, transform_indices = @transform_11, window_bounds = array<i64: 2, 8, 128>}]} {
    %c0 = arith.constant 0 : index
    %c0_0 = arith.constant 0 : index
    %0 = vector.load %arg1[%c0, %c0_0] : memref<16x32xbf16, #tpu.memory_space<vmem>>, vector<16x32xbf16>
    %c0_1 = arith.constant 0 : index
    %c0_2 = arith.constant 0 : index
    %1 = vector.load %arg3[%c0_1, %c0_2] : memref<32x32xbf16, #tpu.memory_space<vmem>>, vector<32x32xbf16>
    %cst = arith.constant dense<0.000000e+00> : vector<16x32xf32>
    %2 = tpu.matmul %0, %1, %cst {dimension_numbers = #tpu.dot_dimension_numbers<[1], [0], [0], [1], [0, 0, 1, 1], [], []>} : vector<16x32xbf16>, vector<32x32xbf16>, vector<16x32xf32> -> vector<16x32xf32>
    %c0_3 = arith.constant 0 : index
    %c0_4 = arith.constant 0 : index
    %3 = vector.load %arg4[%c0_3, %c0_4] : memref<1x32xf32, #tpu.memory_space<vmem>>, vector<1x32xf32>
    %4 = vector.broadcast %3 : vector<1x32xf32> to vector<16x32xf32>
    %5 = arith.addf %2, %4 : vector<16x32xf32>
    %cst_5 = arith.constant 0.00999999977 : f32
    %6 = vector.broadcast %cst_5 : f32 to vector<16x32xf32>
    %7 = arith.mulf %6, %5 : vector<16x32xf32>
    %8 = arith.maximumf %5, %7 : vector<16x32xf32>
    %9 = arith.truncf %8 : vector<16x32xf32> to vector<16x32xbf16>
    %c0_6 = arith.constant 0 : index
    %c0_7 = arith.constant 0 : index
    %10 = vector.load %arg5[%c0_6, %c0_7] : memref<32x32xbf16, #tpu.memory_space<vmem>>, vector<32x32xbf16>
    %cst_8 = arith.constant dense<0.000000e+00> : vector<16x32xf32>
    %11 = tpu.matmul %9, %10, %cst_8 {dimension_numbers = #tpu.dot_dimension_numbers<[1], [0], [0], [1], [0, 0, 1, 1], [], []>} : vector<16x32xbf16>, vector<32x32xbf16>, vector<16x32xf32> -> vector<16x32xf32>
    %c0_9 = arith.constant 0 : index
    %c0_10 = arith.constant 0 : index
    %12 = vector.load %arg6[%c0_9, %c0_10] : memref<1x32xf32, #tpu.memory_space<vmem>>, vector<1x32xf32>
    %13 = vector.broadcast %12 : vector<1x32xf32> to vector<16x32xf32>
    %14 = arith.addf %11, %13 : vector<16x32xf32>
    %15 = arith.truncf %14 : vector<16x32xf32> to vector<16x32xbf16>
    %c0_11 = arith.constant 0 : index
    %c0_12 = arith.constant 0 : index
    %16 = vector.load %arg7[%c0_11, %c0_12] : memref<1x32xf32, #tpu.memory_space<vmem>>, vector<1x32xf32>
    %17 = vector.broadcast %16 : vector<1x32xf32> to vector<16x32xf32>
    %18 = arith.mulf %8, %17 : vector<16x32xf32>
    %cst_13 = arith.constant dense<0.000000e+00> : vector<16xf32>
    %19 = vector.multi_reduction <add>, %18, %cst_13 [1] : vector<16x32xf32> to vector<16xf32>
    %20 = vector.shape_cast %19 : vector<16xf32> to vector<16x1xf32>
    %c0_14 = arith.constant 0 : index
    %c0_15 = arith.constant 0 : index
    %21 = vector.load %arg2[%c0_14, %c0_15] : memref<16x1xf32, #tpu.memory_space<vmem>>, vector<16x1xf32>
    %c0_16 = arith.constant 0 : index
    %c0_17 = arith.constant 0 : index
    %22 = vector.load %arg10[%c0_16, %c0_17] : memref<8x32xf32, #tpu.memory_space<vmem>>, vector<8x32xf32>
    %23 = arith.truncf %22 : vector<8x32xf32> to vector<8x32xbf16>
    %c0_18 = arith.constant 0 : index
    %c0_19 = arith.constant 0 : index
    %24 = vector.load %arg11[%c0_18, %c0_19] : memref<8x128xf32, #tpu.memory_space<vmem>>, vector<8x128xf32>
    %25 = tpu.iota {dimensions = array<i32: 0>} : vector<8x128xi32>
    %c0_20 = arith.constant 0 : index
    %c0_21 = arith.constant 0 : index
    %26 = vector.load %arg8[%c0_20, %c0_21] : memref<1x128xi32, #tpu.memory_space<vmem>>, vector<1x128xi32>
    %27 = vector.broadcast %26 : vector<1x128xi32> to vector<8x128xi32>
    %28 = arith.cmpi sge, %25, %27 : vector<8x128xi32>
    %c0_22 = arith.constant 0 : index
    %c0_23 = arith.constant 0 : index
    %29 = vector.load %arg9[%c0_22, %c0_23] : memref<1x128xi32, #tpu.memory_space<vmem>>, vector<1x128xi32>
    %30 = vector.broadcast %29 : vector<1x128xi32> to vector<8x128xi32>
    %31 = arith.cmpi sle, %25, %30 : vector<8x128xi32>
    %32 = arith.andi %28, %31 : vector<8x128xi1>
    %33 = vector.extract_strided_slice %20 {offsets = [0, 0], sizes = [8, 1], strides = [1, 1]} : vector<16x1xf32> to vector<8x1xf32>
    %34 = vector.extract_strided_slice %21 {offsets = [0, 0], sizes = [8, 1], strides = [1, 1]} : vector<16x1xf32> to vector<8x1xf32>
    %35 = vector.extract_strided_slice %15 {offsets = [0, 0], sizes = [8, 32], strides = [1, 1]} : vector<16x32xbf16> to vector<8x32xbf16>
    %cst_24 = arith.constant 0.000000e+00 : f32
    %36 = vector.broadcast %cst_24 : f32 to vector<8x1xf32>
    %37 = arith.cmpf ogt, %34, %36 : vector<8x1xf32>
    %38 = vector.broadcast %37 : vector<8x1xi1> to vector<8x128xi1>
    %39 = arith.andi %32, %38 : vector<8x128xi1>
    %cst_25 = arith.constant -1.000000e+09 : f32
    %40 = vector.shape_cast %33 : vector<8x1xf32> to vector<8x1xf32>
    %41 = vector.broadcast %40 : vector<8x1xf32> to vector<8x128xf32>
    %42 = vector.broadcast %cst_25 : f32 to vector<8x128xf32>
    %43 = arith.select %39, %41, %42 : vector<8x128xi1>, vector<8x128xf32>
    %cst_26 = arith.constant dense<0xFF800000> : vector<128xf32>
    %44 = vector.multi_reduction <maximumf>, %43, %cst_26 [0] : vector<8x128xf32> to vector<128xf32>
    %45 = vector.shape_cast %44 : vector<128xf32> to vector<1x128xf32>
    %46 = vector.broadcast %45 : vector<1x128xf32> to vector<8x128xf32>
    %47 = arith.subf %43, %46 : vector<8x128xf32>
    %48 = math.exp %47 : vector<8x128xf32>
    %49 = arith.extui %39 : vector<8x128xi1> to vector<8x128xi32>
    %50 = arith.sitofp %49 : vector<8x128xi32> to vector<8x128xf32>
    %51 = arith.mulf %48, %50 : vector<8x128xf32>
    %cst_27 = arith.constant dense<0.000000e+00> : vector<128xf32>
    %52 = vector.multi_reduction <add>, %51, %cst_27 [0] : vector<8x128xf32> to vector<128xf32>
    %53 = vector.shape_cast %52 : vector<128xf32> to vector<1x128xf32>
    %cst_28 = arith.constant 9.99999971E-10 : f32
    %54 = vector.broadcast %cst_28 : f32 to vector<1x128xf32>
    %55 = arith.maximumf %53, %54 : vector<1x128xf32>
    %56 = tpu.reciprocal %55 {approx = true} : vector<1x128xf32> -> vector<1x128xf32>
    %57 = vector.broadcast %56 : vector<1x128xf32> to vector<8x128xf32>
    %58 = arith.mulf %51, %57 : vector<8x128xf32>
    %59 = arith.truncf %58 : vector<8x128xf32> to vector<8x128xbf16>
    %cst_29 = arith.constant dense<0.000000e+00> : vector<32x128xf32>
    %60 = tpu.matmul %35, %59, %cst_29 {dimension_numbers = #tpu.dot_dimension_numbers<[0], [0], [1], [1], [0, 1, 1, 1], [], []>} : vector<8x32xbf16>, vector<8x128xbf16>, vector<32x128xf32> -> vector<32x128xf32>
    %61 = arith.truncf %60 : vector<32x128xf32> to vector<32x128xbf16>
    %cst_30 = arith.constant dense<0.000000e+00> : vector<8x128xf32>
    %62 = tpu.matmul %23, %61, %cst_30 {dimension_numbers = #tpu.dot_dimension_numbers<[1], [0], [0], [1], [0, 0, 1, 1], [], []>} : vector<8x32xbf16>, vector<32x128xbf16>, vector<8x128xf32> -> vector<8x128xf32>
    %63 = arith.addf %62, %24 : vector<8x128xf32>
    %c0_31 = arith.constant 0 : index
    %c0_32 = arith.constant 0 : index
    %c0_33 = arith.constant 0 : index
    %64 = vector.load %arg12[%c0_31, %c0_32, %c0_33] : memref<2x8x128xf32, #tpu.memory_space<vmem>>, vector<1x8x128xf32>
    %65 = vector.shape_cast %64 : vector<1x8x128xf32> to vector<8x128xf32>
    %66 = vector.shape_cast %63 : vector<8x128xf32> to vector<1x8x128xf32>
    tpu.vector_store %arg12[%c0_31, %c0_32, %c0_33], %66 {strides = array<i32>} : memref<2x8x128xf32, #tpu.memory_space<vmem>>, vector<1x8x128xf32>,
    %67 = vector.extract_strided_slice %20 {offsets = [8, 0], sizes = [8, 1], strides = [1, 1]} : vector<16x1xf32> to vector<8x1xf32>
    %68 = vector.extract_strided_slice %21 {offsets = [8, 0], sizes = [8, 1], strides = [1, 1]} : vector<16x1xf32> to vector<8x1xf32>
    %69 = vector.extract_strided_slice %15 {offsets = [8, 0], sizes = [8, 32], strides = [1, 1]} : vector<16x32xbf16> to vector<8x32xbf16>
    %cst_34 = arith.constant 0.000000e+00 : f32
    %70 = vector.broadcast %cst_34 : f32 to vector<8x1xf32>
    %71 = arith.cmpf ogt, %68, %70 : vector<8x1xf32>
    %72 = vector.broadcast %71 : vector<8x1xi1> to vector<8x128xi1>
    %73 = arith.andi %32, %72 : vector<8x128xi1>
    %cst_35 = arith.constant -1.000000e+09 : f32
    %74 = vector.shape_cast %67 : vector<8x1xf32> to vector<8x1xf32>
    %75 = vector.broadcast %74 : vector<8x1xf32> to vector<8x128xf32>
    %76 = vector.broadcast %cst_35 : f32 to vector<8x128xf32>
    %77 = arith.select %73, %75, %76 : vector<8x128xi1>, vector<8x128xf32>
    %cst_36 = arith.constant dense<0xFF800000> : vector<128xf32>
    %78 = vector.multi_reduction <maximumf>, %77, %cst_36 [0] : vector<8x128xf32> to vector<128xf32>
    %79 = vector.shape_cast %78 : vector<128xf32> to vector<1x128xf32>
    %80 = vector.broadcast %79 : vector<1x128xf32> to vector<8x128xf32>
    %81 = arith.subf %77, %80 : vector<8x128xf32>
    %82 = math.exp %81 : vector<8x128xf32>
    %83 = arith.extui %73 : vector<8x128xi1> to vector<8x128xi32>
    %84 = arith.sitofp %83 : vector<8x128xi32> to vector<8x128xf32>
    %85 = arith.mulf %82, %84 : vector<8x128xf32>
    %cst_37 = arith.constant dense<0.000000e+00> : vector<128xf32>
    %86 = vector.multi_reduction <add>, %85, %cst_37 [0] : vector<8x128xf32> to vector<128xf32>
    %87 = vector.shape_cast %86 : vector<128xf32> to vector<1x128xf32>
    %cst_38 = arith.constant 9.99999971E-10 : f32
    %88 = vector.broadcast %cst_38 : f32 to vector<1x128xf32>
    %89 = arith.maximumf %87, %88 : vector<1x128xf32>
    %90 = tpu.reciprocal %89 {approx = true} : vector<1x128xf32> -> vector<1x128xf32>
    %91 = vector.broadcast %90 : vector<1x128xf32> to vector<8x128xf32>
    %92 = arith.mulf %85, %91 : vector<8x128xf32>
    %93 = arith.truncf %92 : vector<8x128xf32> to vector<8x128xbf16>
    %cst_39 = arith.constant dense<0.000000e+00> : vector<32x128xf32>
    %94 = tpu.matmul %69, %93, %cst_39 {dimension_numbers = #tpu.dot_dimension_numbers<[0], [0], [1], [1], [0, 1, 1, 1], [], []>} : vector<8x32xbf16>, vector<8x128xbf16>, vector<32x128xf32> -> vector<32x128xf32>
    %95 = arith.truncf %94 : vector<32x128xf32> to vector<32x128xbf16>
    %cst_40 = arith.constant dense<0.000000e+00> : vector<8x128xf32>
    %96 = tpu.matmul %23, %95, %cst_40 {dimension_numbers = #tpu.dot_dimension_numbers<[1], [0], [0], [1], [0, 0, 1, 1], [], []>} : vector<8x32xbf16>, vector<32x128xbf16>, vector<8x128xf32> -> vector<8x128xf32>
    %97 = arith.addf %96, %24 : vector<8x128xf32>
    %c1 = arith.constant 1 : index
    %c0_41 = arith.constant 0 : index
    %c0_42 = arith.constant 0 : index
    %98 = vector.load %arg12[%c1, %c0_41, %c0_42] : memref<2x8x128xf32, #tpu.memory_space<vmem>>, vector<1x8x128xf32>
    %99 = vector.shape_cast %98 : vector<1x8x128xf32> to vector<8x128xf32>
    %100 = vector.shape_cast %97 : vector<8x128xf32> to vector<1x8x128xf32>
    tpu.vector_store %arg12[%c1, %c0_41, %c0_42], %100 {strides = array<i32>} : memref<2x8x128xf32, #tpu.memory_space<vmem>>, vector<1x8x128xf32>,
    return
  }
  func.func @transform_0(%arg0: i32) -> (i32, i32) {
    %c0_i32 = arith.constant 0 : i32
    %c0_i32_0 = arith.constant 0 : i32
    %c0_i32_1 = arith.constant 0 : i32
    return %c0_i32, %c0_i32_0 : i32, i32
  }
  func.func @transform_1(%arg0: i32) -> (i32, i32) {
    %c0_i32 = arith.constant 0 : i32
    %c0_i32_0 = arith.constant 0 : i32
    %c0_i32_1 = arith.constant 0 : i32
    return %c0_i32, %c0_i32_0 : i32, i32
  }
  func.func @transform_2(%arg0: i32) -> (i32, i32) {
    %c0_i32 = arith.constant 0 : i32
    %c0_i32_0 = arith.constant 0 : i32
    %c0_i32_1 = arith.constant 0 : i32
    return %c0_i32, %c0_i32_0 : i32, i32
  }
  func.func @transform_3(%arg0: i32) -> (i32, i32) {
    %c0_i32 = arith.constant 0 : i32
    %c0_i32_0 = arith.constant 0 : i32
    %c0_i32_1 = arith.constant 0 : i32
    return %c0_i32, %c0_i32_0 : i32, i32
  }
  func.func @transform_4(%arg0: i32) -> (i32, i32) {
    %c0_i32 = arith.constant 0 : i32
    %c0_i32_0 = arith.constant 0 : i32
    %c0_i32_1 = arith.constant 0 : i32
    return %c0_i32, %c0_i32_0 : i32, i32
  }
  func.func @transform_5(%arg0: i32) -> (i32, i32) {
    %c0_i32 = arith.constant 0 : i32
    %c0_i32_0 = arith.constant 0 : i32
    %c0_i32_1 = arith.constant 0 : i32
    return %c0_i32, %c0_i32_0 : i32, i32
  }
  func.func @transform_6(%arg0: i32) -> (i32, i32) {
    %c0_i32 = arith.constant 0 : i32
    %c0_i32_0 = arith.constant 0 : i32
    %c0_i32_1 = arith.constant 0 : i32
    return %c0_i32, %c0_i32_0 : i32, i32
  }
  func.func @transform_7(%arg0: i32) -> (i32, i32) {
    %c0_i32 = arith.constant 0 : i32
    %c0_i32_0 = arith.constant 0 : i32
    %c0_i32_1 = arith.constant 0 : i32
    return %c0_i32, %c0_i32_0 : i32, i32
  }
  func.func @transform_8(%arg0: i32) -> (i32, i32) {
    %c0_i32 = arith.constant 0 : i32
    %c0_i32_0 = arith.constant 0 : i32
    %c0_i32_1 = arith.constant 0 : i32
    return %c0_i32, %c0_i32_0 : i32, i32
  }
  func.func @transform_9(%arg0: i32) -> (i32, i32) {
    %c0_i32 = arith.constant 0 : i32
    %c0_i32_0 = arith.constant 0 : i32
    %c0_i32_1 = arith.constant 0 : i32
    return %c0_i32, %c0_i32_0 : i32, i32
  }
  func.func @transform_10(%arg0: i32) -> (i32, i32) {
    %c0_i32 = arith.constant 0 : i32
    %c0_i32_0 = arith.constant 0 : i32
    %c0_i32_1 = arith.constant 0 : i32
    return %c0_i32, %c0_i32_0 : i32, i32
  }
  func.func @transform_11(%arg0: i32) -> (i32, i32, i32) {
    %c0_i32 = arith.constant 0 : i32
    %c0_i32_0 = arith.constant 0 : i32
    %c0_i32_1 = arith.constant 0 : i32
    %c0_i32_2 = arith.constant 0 : i32
    return %c0_i32, %c0_i32_0, %c0_i32_1 : i32, i32, i32
  }
}

</mosaic_0001>

<llo_original>
// kernel: forward.1
$region0: #{forward.1}
  #allocation0 [shape = 'u32[]', space=smem, size = 0x4, offset = 0x4, fixed_abs, tag = 'smem constant byte address 0x4 - core index']
  #allocation1 [shape = 'u32[144,128]{1,0:T(1,128)}', space=vmem, size = 0x12000, scoped, tag = 'internal scratch']
  %s0 = inlined_call_operand.vmem [shape: bf16[16,32], index: 0, kind: input, shape index: {}]
  %s1 = inlined_call_operand.vmem [shape: f32[16,1], index: 1, kind: input, shape index: {}]
  %s2 = inlined_call_operand.vmem [shape: bf16[32,32], index: 2, kind: input, shape index: {}]
  %s3 = inlined_call_operand.vmem [shape: f32[1,32], index: 3, kind: input, shape index: {}]
  %s4 = inlined_call_operand.vmem [shape: bf16[32,32], index: 4, kind: input, shape index: {}]
  %s5 = inlined_call_operand.vmem [shape: f32[1,32], index: 5, kind: input, shape index: {}]
  %s6 = inlined_call_operand.vmem [shape: f32[1,32], index: 6, kind: input, shape index: {}]
  %s7 = inlined_call_operand.vmem [shape: s32[1,128], index: 7, kind: input, shape index: {}]
  %s8 = inlined_call_operand.vmem [shape: s32[1,128], index: 8, kind: input, shape index: {}]
  %s9 = inlined_call_operand.vmem [shape: f32[8,32], index: 9, kind: input, shape index: {}]
  %s10 = inlined_call_operand.vmem [shape: f32[8,128], index: 10, kind: input, shape index: {}]
  %s11 = inlined_call_operand.vmem [shape: f32[2,8,128], index: 11, kind: output, shape index: {}]
  %s12 = sld [smem:[#allocation0]]
  $region54: #{forward.1} parent=0
    _
  %s14 = ssub.s32 1, %s12
  %s15 = scalar_select 0, %s14, %s12
  // Predicated region
  $region2: #{forward.1} parent=0 // pred_check
    _
  $region3: #{forward.1} parent=0 // pred_check_branch
    %17 = sbr.rel (0) target = $region5
  $region4: #{forward.1} parent=0 // pred_region
    _
  $region5: #{forward.1} parent=0 // pred_fallthru
    _
  // Predicated region
  $region6: #{forward.1} parent=0 // pred_check
    _
  $region7: #{forward.1} parent=0 // pred_check_branch
    %19 = sbr.rel (0) target = $region9
  $region8: #{forward.1} parent=0 // pred_region
    _
  $region9: #{forward.1} parent=0 // pred_fallthru
    _
  // Predicated region
  $region10: #{forward.1} parent=0 // pred_check
    _
  $region11: #{forward.1} parent=0 // pred_check_branch
    %21 = sbr.rel (0) target = $region13
  $region12: #{forward.1} parent=0 // pred_region
    _
  $region13: #{forward.1} parent=0 // pred_fallthru
    _
  // Predicated region
  $region14: #{forward.1} parent=0 // pred_check
    _
  $region15: #{forward.1} parent=0 // pred_check_branch
    %23 = sbr.rel (0) target = $region17
  $region16: #{forward.1} parent=0 // pred_region
    _
  $region17: #{forward.1} parent=0 // pred_fallthru
    _
  // Predicated region
  $region18: #{forward.1} parent=0 // pred_check
    _
  $region19: #{forward.1} parent=0 // pred_check_branch
    %25 = sbr.rel (0) target = $region21
  $region20: #{forward.1} parent=0 // pred_region
    _
  $region21: #{forward.1} parent=0 // pred_fallthru
    _
  // Predicated region
  $region22: #{forward.1} parent=0 // pred_check
    _
  $region23: #{forward.1} parent=0 // pred_check_branch
    %27 = sbr.rel (0) target = $region25
  $region24: #{forward.1} parent=0 // pred_region
    _
  $region25: #{forward.1} parent=0 // pred_fallthru
    _
  // Predicated region
  $region26: #{forward.1} parent=0 // pred_check
    _
  $region27: #{forward.1} parent=0 // pred_check_branch
    %29 = sbr.rel (0) target = $region29
  $region28: #{forward.1} parent=0 // pred_region
    _
  $region29: #{forward.1} parent=0 // pred_fallthru
    _
  // Predicated region
  $region30: #{forward.1} parent=0 // pred_check
    _
  $region31: #{forward.1} parent=0 // pred_check_branch
    %31 = sbr.rel (0) target = $region33
  $region32: #{forward.1} parent=0 // pred_region
    _
  $region33: #{forward.1} parent=0 // pred_fallthru
    _
  // Predicated region
  $region34: #{forward.1} parent=0 // pred_check
    _
  $region35: #{forward.1} parent=0 // pred_check_branch
    %33 = sbr.rel (0) target = $region37
  $region36: #{forward.1} parent=0 // pred_region
    _
  $region37: #{forward.1} parent=0 // pred_fallthru
    _
  // Predicated region
  $region38: #{forward.1} parent=0 // pred_check
    _
  $region39: #{forward.1} parent=0 // pred_check_branch
    %35 = sbr.rel (0) target = $region41
  $region40: #{forward.1} parent=0 // pred_region
    _
  $region41: #{forward.1} parent=0 // pred_fallthru
    _
  // Predicated region
  $region42: #{forward.1} parent=0 // pred_check
    _
  $region43: #{forward.1} parent=0 // pred_check_branch
    %37 = sbr.rel (0) target = $region45
  $region44: #{forward.1} parent=0 // pred_region
    _
  $region45: #{forward.1} parent=0 // pred_fallthru
    _
  %v39 = vld [vmem:[%s0] sm:$0xf]
  %v40 = vld [vmem:[%s0 + $0x4] sm:$0xf]
  %v41 = vld [vmem:[%s2] sm:$0xf]
  %v42 = vld [vmem:[%s2 + $0x4] sm:$0xf]
  %v43 = vld [vmem:[%s2 + $0x8] sm:$0xf]
  %v44 = vld [vmem:[%s2 + $0xc] sm:$0xf]
  %v45 = vld [vmem:[%s3] sm:$0x1]
  %v47 = vlaneseq
  %v48 = vshrl.u32 %v47, 7
  %v49 = vsub.s32 0, %v48
  %v50 = vrot.slane %v45, %v49
  %v54 = vunpack.c.l.b16 %v39
  %v55 = vunpack.c.l.b16 %v40
  %v56 = vpack.c.b16 %v55, %v54
  %v61 = vunpack.c.l.b16 %v41
  %v62 = vunpack.c.l.b16 %v42
  %v63 = vunpack.c.l.b16 %v43
  %v64 = vunpack.c.l.b16 %v44
  %v65 = vpack.c.b16 %v62, %v61
  %v66 = vpack.c.b16 %v64, %v63
  %vm69 = vcmask 261120
  %v71 = vsel %vm69, %v56, 0
  %73 = vmatprep.subr.bf16.mxu0 0
  %74 = vmatpush1.bf16.msra.mxu0 %v65
  %75 = vmatprep.subr.bf16.mxu0 0
  %76 = vmatpush1.bf16.msra.mxu0 %v66
  %77 = vmatprep.subr.bf16.mxu0 0
  %78 = vmatpush1.bf16.msra.mxu0 0
  %79 = vmatprep.subr.bf16.mxu0 0
  %80 = vmatpush1.bf16.msra.mxu0 0
  %81 = vmatprep.subr.bf16.mxu0 0
  %82 = vmatpush1.bf16.msra.mxu0 0
  %83 = vmatprep.subr.bf16.mxu0 0
  %84 = vmatpush1.bf16.msra.mxu0 0
  %85 = vmatprep.subr.bf16.mxu0 0
  %86 = vmatpush1.bf16.msra.mxu0 0
  %87 = vmatprep.subr.bf16.mxu0 0
  %88 = vmatpush1.bf16.msra.mxu0 0
  %89 = vmatprep.subr.bf16.mxu0 0
  %90 = vmatpush1.bf16.msra.mxu0 0
  %91 = vmatprep.subr.bf16.mxu0 0
  %92 = vmatpush1.bf16.msra.mxu0 0
  %93 = vmatprep.subr.bf16.mxu0 0
  %94 = vmatpush1.bf16.msra.mxu0 0
  %95 = vmatprep.subr.bf16.mxu0 0
  %96 = vmatpush1.bf16.msra.mxu0 0
  %97 = vmatprep.subr.bf16.mxu0 0
  %98 = vmatpush1.bf16.msra.mxu0 0
  %99 = vmatprep.subr.bf16.mxu0 0
  %100 = vmatpush1.bf16.msra.mxu0 0
  %101 = vmatprep.subr.bf16.mxu0 0
  %102 = vmatpush1.bf16.msra.mxu0 0
  %103 = vmatprep.subr.bf16.mxu0 0
  %104 = vmatpush1.bf16.msra.mxu0 0
  %105 = vmatprep.mubr.bf16.mxu0 0
  %106 = vmatmul.mubr.bf16.gmra.mrb[0].mxu0 %v71
  %v107 = vpop.f32.mrb[0].mxu0
  %v108 = vadd.f32 %v50, %v107
  %v109 = vpop.f32.mrb[0].mxu0
  %v110 = vpop.f32.mrb[0].mxu0
  %v111 = vadd.f32 %v50, %v110
  %v112 = vpop.f32.mrb[0].mxu0
  %113 = vdwg.mxu0
  %v114 = vmul.f32 %v108, 0.01
  %v115 = vmul.f32 %v111, 0.01
  %v116 = vmax.f32 %v108, %v114
  %v117 = vmax.f32 %v111, %v115
  %v118 = vpack.c.bf16 %v117, %v116
  %v119 = vld [vmem:[%s4] sm:$0xf]
  %v120 = vld [vmem:[%s4 + $0x4] sm:$0xf]
  %v121 = vld [vmem:[%s4 + $0x8] sm:$0xf]
  %v122 = vld [vmem:[%s4 + $0xc] sm:$0xf]
  %v123 = vld [vmem:[%s5] sm:$0x1]
  %v125 = vlaneseq
  %v126 = vshrl.u32 %v125, 7
  %v127 = vsub.s32 0, %v126
  %v128 = vrot.slane %v123, %v127
  %v134 = vunpack.c.l.b16 %v119
  %v135 = vunpack.c.l.b16 %v120
  %v136 = vunpack.c.l.b16 %v121
  %v137 = vunpack.c.l.b16 %v122
  %v138 = vpack.c.b16 %v135, %v134
  %v139 = vpack.c.b16 %v137, %v136
  %v143 = vsel %vm69, %v118, 0
  %145 = vmatprep.subr.bf16.mxu0 0
  %146 = vmatpush1.bf16.msra.mxu0 %v138
  %147 = vmatprep.subr.bf16.mxu0 0
  %148 = vmatpush1.bf16.msra.mxu0 %v139
  %149 = vmatprep.subr.bf16.mxu0 0
  %150 = vmatpush1.bf16.msra.mxu0 0
  %151 = vmatprep.subr.bf16.mxu0 0
  %152 = vmatpush1.bf16.msra.mxu0 0
  %153 = vmatprep.subr.bf16.mxu0 0
  %154 = vmatpush1.bf16.msra.mxu0 0
  %155 = vmatprep.subr.bf16.mxu0 0
  %156 = vmatpush1.bf16.msra.mxu0 0
  %157 = vmatprep.subr.bf16.mxu0 0
  %158 = vmatpush1.bf16.msra.mxu0 0
  %159 = vmatprep.subr.bf16.mxu0 0
  %160 = vmatpush1.bf16.msra.mxu0 0
  %161 = vmatprep.subr.bf16.mxu0 0
  %162 = vmatpush1.bf16.msra.mxu0 0
  %163 = vmatprep.subr.bf16.mxu0 0
  %164 = vmatpush1.bf16.msra.mxu0 0
  %165 = vmatprep.subr.bf16.mxu0 0
  %166 = vmatpush1.bf16.msra.mxu0 0
  %167 = vmatprep.subr.bf16.mxu0 0
  %168 = vmatpush1.bf16.msra.mxu0 0
  %169 = vmatprep.subr.bf16.mxu0 0
  %170 = vmatpush1.bf16.msra.mxu0 0
  %171 = vmatprep.subr.bf16.mxu0 0
  %172 = vmatpush1.bf16.msra.mxu0 0
  %173 = vmatprep.subr.bf16.mxu0 0
  %174 = vmatpush1.bf16.msra.mxu0 0
  %175 = vmatprep.subr.bf16.mxu0 0
  %176 = vmatpush1.bf16.msra.mxu0 0
  %177 = vmatprep.mubr.bf16.mxu0 0
  %178 = vmatmul.mubr.bf16.gmra.mrb[0].mxu0 %v143
  %v179 = vpop.f32.mrb[0].mxu0
  %v180 = vadd.f32 %v128, %v179
  %v181 = vpop.f32.mrb[0].mxu0
  %v182 = vpop.f32.mrb[0].mxu0
  %v183 = vadd.f32 %v128, %v182
  %v184 = vpop.f32.mrb[0].mxu0
  %185 = vdwg.mxu0
  %v186 = vpack.c.bf16 %v183, %v180
  %v187 = vld [vmem:[%s6] sm:$0x1]
  %v189 = vlaneseq
  %v190 = vshrl.u32 %v189, 7
  %v191 = vsub.s32 0, %v190
  %v192 = vrot.slane %v187, %v191
  %v194 = vmul.f32 %v116, %v192
  %v195 = vmul.f32 %v117, %v192
  %v196 = vsel %vm69, %v194, 0.0
  %197 = vadd.xlane.f32.xlu0 %v196
  %v198 = vpop.xlane.xlu0 %197
  %v199 = vsel %vm69, %v195, 0.0
  %200 = vadd.xlane.f32.xlu0 %v199
  %v201 = vpop.xlane.xlu0 %200
  %v202 = vld [vmem:[%s1] sm:$0xff]
  %v203 = vld [vmem:[%s1 + $0x8] sm:$0xff]
  %v204 = vld [vmem:[%s9] sm:$0xff]
  %v205 = vpack.c.bf16 %v204, %v204
  %v206 = vld [vmem:[%s10] sm:$0xff]
  %v207 = vlaneseq
  %v208 = vshrl.u32 %v207, 7
  %v209 = vld [vmem:[%s7] sm:$0x1]
  %v210 = vlaneseq
  %v211 = vshrl.u32 %v210, 7
  %v212 = vsub.s32 0, %v211
  %v213 = vrot.slane %v209, %v212
  %vm214 = vcmp.ge.s32.totalorder %v208, %v213
  %v215 = vld [vmem:[%s8] sm:$0x1]
  %v216 = vlaneseq
  %v217 = vshrl.u32 %v216, 7
  %v218 = vsub.s32 0, %v217
  %v219 = vrot.slane %v215, %v218
  %vm220 = vcmp.le.s32.totalorder %v208, %v219
  %vm221 = vmand %vm214, %vm220
  %vm222 = vcmp.gt.f32.partialorder %v202, 0.0
  %v223 = vsel %vm222, 1, 0
  %224 = vset.pattern.permute.xlu0 0
  %225 = vperm.xlu0 %224, %v223
  %v226 = vpop.permute.xlu0 %225
  %vm227 = vcmp.eq.s32.totalorder %v226, 1
  %vm228 = vmand %vm221, %vm227
  %v229 = vsel %vm228, %v198, -1e+09
  %v230 = vrot.slane %v229, 4
  %v231 = vmax.f32 %v229, %v230
  %v232 = vrot.slane %v231, 2
  %v233 = vmax.f32 %v231, %v232
  %v234 = vrot.slane %v233, 1
  %v235 = vmax.f32 %v233, %v234
  %v236 = vsub.f32 %v229, %v235
  %v237 = vmul.f32 %v236, 1.442695
  %v238 = vpow.pop %v237
  %v239 = vsel %vm228, 1, 0
  %v240 = vcvt.s32.f32 %v239
  %v241 = vmul.f32 %v238, %v240
  %v242 = vrot.slane %v241, 4
  %v243 = vadd.f32 %v241, %v242
  %v244 = vrot.slane %v243, 2
  %v245 = vadd.f32 %v243, %v244
  %v246 = vrot.slane %v245, 1
  %v247 = vadd.f32 %v245, %v246
  %v248 = vmax.f32 %v247, 1e-09
  %v249 = vrcp.pop %v248
  %v250 = vmul.f32 %v241, %v249
  %v251 = vpack.c.bf16 %v250, %v250
  %252 = vxpose.xlu0.c.b16.start [1/8] %v186, 128
  %253 = vxpose.xlu0.c.b16.cont [2/8] 0, 128
  %254 = vxpose.xlu0.c.b16.cont [3/8] 0, 128
  %255 = vxpose.xlu0.c.b16.cont [4/8] 0, 128
  %256 = vxpose.xlu0.c.b16.cont [5/8] 0, 128
  %257 = vxpose.xlu0.c.b16.cont [6/8] 0, 128
  %258 = vxpose.xlu0.c.b16.cont [7/8] 0, 128
  %259 = vxpose.xlu0.c.b16.end [8/8] 0, 128
  %v260 = vpop.trf.xlu0
  %v261 = vpop.trf.xlu0
  %v262 = vpop.trf.xlu0
  %v263 = vpop.trf.xlu0
  %v264 = vpop.trf.xlu0
  %v265 = vpop.trf.xlu0
  %v266 = vpop.trf.xlu0
  %v267 = vpop.trf.xlu0
  %vm268 = vcmask 64512
  %v270 = vsel %vm268, %v260, 0
  %v273 = vsel %vm268, %v261, 0
  %vm275 = vcmask 1043456
  %v277 = vsel %vm275, %v251, 0
  %279 = vmatprep.subr.bf16.mxu0 0
  %280 = vmatpush1.bf16.msra.mxu0 %v277
  %281 = vmatprep.subr.bf16.mxu0 0
  %282 = vmatpush1.bf16.msra.mxu0 0
  %283 = vmatprep.subr.bf16.mxu0 0
  %284 = vmatpush1.bf16.msra.mxu0 0
  %285 = vmatprep.subr.bf16.mxu0 0
  %286 = vmatpush1.bf16.msra.mxu0 0
  %287 = vmatprep.subr.bf16.mxu0 0
  %288 = vmatpush1.bf16.msra.mxu0 0
  %289 = vmatprep.subr.bf16.mxu0 0
  %290 = vmatpush1.bf16.msra.mxu0 0
  %291 = vmatprep.subr.bf16.mxu0 0
  %292 = vmatpush1.bf16.msra.mxu0 0
  %293 = vmatprep.subr.bf16.mxu0 0
  %294 = vmatpush1.bf16.msra.mxu0 0
  %295 = vmatprep.subr.bf16.mxu0 0
  %296 = vmatpush1.bf16.msra.mxu0 0
  %297 = vmatprep.subr.bf16.mxu0 0
  %298 = vmatpush1.bf16.msra.mxu0 0
  %299 = vmatprep.subr.bf16.mxu0 0
  %300 = vmatpush1.bf16.msra.mxu0 0
  %301 = vmatprep.subr.bf16.mxu0 0
  %302 = vmatpush1.bf16.msra.mxu0 0
  %303 = vmatprep.subr.bf16.mxu0 0
  %304 = vmatpush1.bf16.msra.mxu0 0
  %305 = vmatprep.subr.bf16.mxu0 0
  %306 = vmatpush1.bf16.msra.mxu0 0
  %307 = vmatprep.subr.bf16.mxu0 0
  %308 = vmatpush1.bf16.msra.mxu0 0
  %309 = vmatprep.subr.bf16.mxu0 0
  %310 = vmatpush1.bf16.msra.mxu0 0
  %311 = vmatprep.mubr.bf16.mxu0 0
  %312 = vmatmul.mubr.bf16.gmra.mrb[0].mxu0 %v270
  %v313 = vpop.f32.mrb[0].mxu0
  %v314 = vadd.f32 0.0, %v313
  %v315 = vpop.f32.mrb[0].mxu0
  %v316 = vpop.f32.mrb[0].mxu0
  %v317 = vadd.f32 0.0, %v316
  %v318 = vpop.f32.mrb[0].mxu0
  %319 = vmatprep.mubr.bf16.mxu0 0
  %320 = vmatmul.mubr.bf16.gmra.mrb[0].mxu0 %v273
  %v321 = vpop.f32.mrb[0].mxu0
  %v322 = vadd.f32 0.0, %v321
  %v323 = vpop.f32.mrb[0].mxu0
  %v324 = vpop.f32.mrb[0].mxu0
  %v325 = vadd.f32 0.0, %v324
  %v326 = vpop.f32.mrb[0].mxu0
  %327 = vdwg.mxu0
  %v328 = vpack.c.bf16 %v317, %v314
  %v329 = vpack.c.bf16 %v325, %v322
  %v331 = vsel %vm69, %v205, 0
  %333 = vmatprep.subr.bf16.mxu0 0
  %334 = vmatpush1.bf16.msra.mxu0 %v328
  %335 = vmatprep.subr.bf16.mxu0 0
  %336 = vmatpush1.bf16.msra.mxu0 %v329
  %337 = vmatprep.subr.bf16.mxu0 0
  %338 = vmatpush1.bf16.msra.mxu0 0
  %339 = vmatprep.subr.bf16.mxu0 0
  %340 = vmatpush1.bf16.msra.mxu0 0
  %341 = vmatprep.subr.bf16.mxu0 0
  %342 = vmatpush1.bf16.msra.mxu0 0
  %343 = vmatprep.subr.bf16.mxu0 0
  %344 = vmatpush1.bf16.msra.mxu0 0
  %345 = vmatprep.subr.bf16.mxu0 0
  %346 = vmatpush1.bf16.msra.mxu0 0
  %347 = vmatprep.subr.bf16.mxu0 0
  %348 = vmatpush1.bf16.msra.mxu0 0
  %349 = vmatprep.subr.bf16.mxu0 0
  %350 = vmatpush1.bf16.msra.mxu0 0
  %351 = vmatprep.subr.bf16.mxu0 0
  %352 = vmatpush1.bf16.msra.mxu0 0
  %353 = vmatprep.subr.bf16.mxu0 0
  %354 = vmatpush1.bf16.msra.mxu0 0
  %355 = vmatprep.subr.bf16.mxu0 0
  %356 = vmatpush1.bf16.msra.mxu0 0
  %357 = vmatprep.subr.bf16.mxu0 0
  %358 = vmatpush1.bf16.msra.mxu0 0
  %359 = vmatprep.subr.bf16.mxu0 0
  %360 = vmatpush1.bf16.msra.mxu0 0
  %361 = vmatprep.subr.bf16.mxu0 0
  %362 = vmatpush1.bf16.msra.mxu0 0
  %363 = vmatprep.subr.bf16.mxu0 0
  %364 = vmatpush1.bf16.msra.mxu0 0
  %365 = vmatprep.mubr.bf16.mxu0 0
  %366 = vmatmul.mubr.bf16.gmra.mrb[0].mxu0 %v331
  %v367 = vpop.f32.mrb[0].mxu0
  %v368 = vadd.f32 %v206, %v367
  %v369 = vpop.f32.mrb[0].mxu0
  %v370 = vpop.f32.mrb[0].mxu0
  %v371 = vpop.f32.mrb[0].mxu0
  %372 = vdwg.mxu0
  %373 = vst [vmem:[%s11] sm:$0xff] %v368
  %vm374 = vcmp.gt.f32.partialorder %v203, 0.0
  %v375 = vsel %vm374, 1, 0
  %376 = vset.pattern.permute.xlu0 0
  %377 = vperm.xlu0 %376, %v375
  %v378 = vpop.permute.xlu0 %377
  %vm379 = vcmp.eq.s32.totalorder %v378, 1
  %vm380 = vmand %vm221, %vm379
  %v381 = vsel %vm380, %v201, -1e+09
  %v382 = vrot.slane %v381, 4
  %v383 = vmax.f32 %v381, %v382
  %v384 = vrot.slane %v383, 2
  %v385 = vmax.f32 %v383, %v384
  %v386 = vrot.slane %v385, 1
  %v387 = vmax.f32 %v385, %v386
  %v388 = vsub.f32 %v381, %v387
  %v389 = vmul.f32 %v388, 1.442695
  %v390 = vpow.pop %v389
  %v391 = vsel %vm380, 1, 0
  %v392 = vcvt.s32.f32 %v391
  %v393 = vmul.f32 %v390, %v392
  %v394 = vrot.slane %v393, 4
  %v395 = vadd.f32 %v393, %v394
  %v396 = vrot.slane %v395, 2
  %v397 = vadd.f32 %v395, %v396
  %v398 = vrot.slane %v397, 1
  %v399 = vadd.f32 %v397, %v398
  %v400 = vmax.f32 %v399, 1e-09
  %v401 = vrcp.pop %v400
  %v402 = vmul.f32 %v393, %v401
  %v403 = vpack.c.bf16 %v402, %v402
  %v405 = vrot.slane %v186, 4
  %407 = vxpose.xlu0.c.b16.start [1/8] %v405, 128
  %408 = vxpose.xlu0.c.b16.cont [2/8] 0, 128
  %409 = vxpose.xlu0.c.b16.cont [3/8] 0, 128
  %410 = vxpose.xlu0.c.b16.cont [4/8] 0, 128
  %411 = vxpose.xlu0.c.b16.cont [5/8] 0, 128
  %412 = vxpose.xlu0.c.b16.cont [6/8] 0, 128
  %413 = vxpose.xlu0.c.b16.cont [7/8] 0, 128
  %414 = vxpose.xlu0.c.b16.end [8/8] 0, 128
  %v415 = vpop.trf.xlu0
  %v416 = vpop.trf.xlu0
  %v417 = vpop.trf.xlu0
  %v418 = vpop.trf.xlu0
  %v419 = vpop.trf.xlu0
  %v420 = vpop.trf.xlu0
  %v421 = vpop.trf.xlu0
  %v422 = vpop.trf.xlu0
  %v424 = vsel %vm268, %v415, 0
  %v427 = vsel %vm268, %v416, 0
  %v430 = vsel %vm275, %v403, 0
  %432 = vmatprep.subr.bf16.mxu0 0
  %433 = vmatpush1.bf16.msra.mxu0 %v430
  %434 = vmatprep.subr.bf16.mxu0 0
  %435 = vmatpush1.bf16.msra.mxu0 0
  %436 = vmatprep.subr.bf16.mxu0 0
  %437 = vmatpush1.bf16.msra.mxu0 0
  %438 = vmatprep.subr.bf16.mxu0 0
  %439 = vmatpush1.bf16.msra.mxu0 0
  %440 = vmatprep.subr.bf16.mxu0 0
  %441 = vmatpush1.bf16.msra.mxu0 0
  %442 = vmatprep.subr.bf16.mxu0 0
  %443 = vmatpush1.bf16.msra.mxu0 0
  %444 = vmatprep.subr.bf16.mxu0 0
  %445 = vmatpush1.bf16.msra.mxu0 0
  %446 = vmatprep.subr.bf16.mxu0 0
  %447 = vmatpush1.bf16.msra.mxu0 0
  %448 = vmatprep.subr.bf16.mxu0 0
  %449 = vmatpush1.bf16.msra.mxu0 0
  %450 = vmatprep.subr.bf16.mxu0 0
  %451 = vmatpush1.bf16.msra.mxu0 0
  %452 = vmatprep.subr.bf16.mxu0 0
  %453 = vmatpush1.bf16.msra.mxu0 0
  %454 = vmatprep.subr.bf16.mxu0 0
  %455 = vmatpush1.bf16.msra.mxu0 0
  %456 = vmatprep.subr.bf16.mxu0 0
  %457 = vmatpush1.bf16.msra.mxu0 0
  %458 = vmatprep.subr.bf16.mxu0 0
  %459 = vmatpush1.bf16.msra.mxu0 0
  %460 = vmatprep.subr.bf16.mxu0 0
  %461 = vmatpush1.bf16.msra.mxu0 0
  %462 = vmatprep.subr.bf16.mxu0 0
  %463 = vmatpush1.bf16.msra.mxu0 0
  %464 = vmatprep.mubr.bf16.mxu0 0
  %465 = vmatmul.mubr.bf16.gmra.mrb[0].mxu0 %v424
  %v466 = vpop.f32.mrb[0].mxu0
  %v467 = vadd.f32 0.0, %v466
  %v468 = vpop.f32.mrb[0].mxu0
  %v469 = vpop.f32.mrb[0].mxu0
  %v470 = vadd.f32 0.0, %v469
  %v471 = vpop.f32.mrb[0].mxu0
  %472 = vmatprep.mubr.bf16.mxu0 0
  %473 = vmatmul.mubr.bf16.gmra.mrb[0].mxu0 %v427
  %v474 = vpop.f32.mrb[0].mxu0
  %v475 = vadd.f32 0.0, %v474
  %v476 = vpop.f32.mrb[0].mxu0
  %v477 = vpop.f32.mrb[0].mxu0
  %v478 = vadd.f32 0.0, %v477
  %v479 = vpop.f32.mrb[0].mxu0
  %480 = vdwg.mxu0
  %v481 = vpack.c.bf16 %v470, %v467
  %v482 = vpack.c.bf16 %v478, %v475
  %483 = vmatprep.subr.bf16.mxu0 0
  %484 = vmatpush1.bf16.msra.mxu0 %v481
  %485 = vmatprep.subr.bf16.mxu0 0
  %486 = vmatpush1.bf16.msra.mxu0 %v482
  %487 = vmatprep.subr.bf16.mxu0 0
  %488 = vmatpush1.bf16.msra.mxu0 0
  %489 = vmatprep.subr.bf16.mxu0 0
  %490 = vmatpush1.bf16.msra.mxu0 0
  %491 = vmatprep.subr.bf16.mxu0 0
  %492 = vmatpush1.bf16.msra.mxu0 0
  %493 = vmatprep.subr.bf16.mxu0 0
  %494 = vmatpush1.bf16.msra.mxu0 0
  %495 = vmatprep.subr.bf16.mxu0 0
  %496 = vmatpush1.bf16.msra.mxu0 0
  %497 = vmatprep.subr.bf16.mxu0 0
  %498 = vmatpush1.bf16.msra.mxu0 0
  %499 = vmatprep.subr.bf16.mxu0 0
  %500 = vmatpush1.bf16.msra.mxu0 0
  %501 = vmatprep.subr.bf16.mxu0 0
  %502 = vmatpush1.bf16.msra.mxu0 0
  %503 = vmatprep.subr.bf16.mxu0 0
  %504 = vmatpush1.bf16.msra.mxu0 0
  %505 = vmatprep.subr.bf16.mxu0 0
  %506 = vmatpush1.bf16.msra.mxu0 0
  %507 = vmatprep.subr.bf16.mxu0 0
  %508 = vmatpush1.bf16.msra.mxu0 0
  %509 = vmatprep.subr.bf16.mxu0 0
  %510 = vmatpush1.bf16.msra.mxu0 0
  %511 = vmatprep.subr.bf16.mxu0 0
  %512 = vmatpush1.bf16.msra.mxu0 0
  %513 = vmatprep.subr.bf16.mxu0 0
  %514 = vmatpush1.bf16.msra.mxu0 0
  %515 = vmatprep.mubr.bf16.mxu0 0
  %516 = vmatmul.mubr.bf16.gmra.mrb[0].mxu0 %v331
  %v517 = vpop.f32.mrb[0].mxu0
  %v518 = vadd.f32 %v206, %v517
  %v519 = vpop.f32.mrb[0].mxu0
  %v520 = vpop.f32.mrb[0].mxu0
  %v521 = vpop.f32.mrb[0].mxu0
  %522 = vdwg.mxu0
  %s523 = scalar_lea.vmem %s11, 8
  %524 = vst [vmem:[%s523] sm:$0xff] %v518
  // Predicated region
  $region46: #{forward.1} parent=0 // pred_check
    _
  $region47: #{forward.1} parent=0 // pred_check_branch
    %526 = sbr.rel (0) target = $region49
  $region48: #{forward.1} parent=0 // pred_region
    _
  $region49: #{forward.1} parent=0 // pred_fallthru
    _
  // Predicated region
  $region50: #{forward.1} parent=0 // pred_check
    _
  $region51: #{forward.1} parent=0 // pred_check_branch
    %528 = sbr.rel (0) target = $region53
  $region52: #{forward.1} parent=0 // pred_region
    _
  $region53: #{forward.1} parent=0 // pred_fallthru
    _

</llo_original>
